<compile_context>
chip_gen: v7x
topology: tpu7x:2x2x1
jax: 0.10.0
libtpu: 0.0.40
codegen_flags: <defaults>
</compile_context>

<pallas_src>
import functools

import jax
import jax.numpy as jnp
from jax.experimental import pallas as pl
from jax.experimental.pallas import tpu as pltpu


def _attn_kernel(x9_ref, wfused_ref, temp_ref, mask_ref, wproj_ref, o_ref):
    """Fused MDTA attention for one batch element.

    x9_ref    : (1, 9*C, HW)  im2col (3x3 shifted copies) of the input
    wfused_ref: (3*C, 9*C)    fused (depthwise3x3 o qkv1x1) weight
    temp_ref  : (C, 1)        per-row temperature (head value repeated)
    mask_ref  : (C, C)        additive block-diagonal head mask (0 / -1e30)
    wproj_ref : (C, C)        project_out 1x1 weight
    o_ref     : (1, C, HW)
    """
    C = o_ref.shape[1]

    x9 = x9_ref[0]                                            # (9C, HW)

    # qkv 1x1 conv + depthwise 3x3 conv as ONE matmul (K = 9*C) on the MXU.
    qkv = jnp.dot(wfused_ref[...], x9,
                  preferred_element_type=jnp.float32)         # (3C, HW)

    q = qkv[:C]
    k = qkv[C:2 * C]
    v = qkv[2 * C:]

    # L2-normalize each channel row over HW (lane axis), matching
    # torch.nn.functional.normalize(dim=-1, eps=1e-12).  Per-head temperature
    # is folded into the q row scale; divides are (C,1), multiplies (C,HW).
    qn_scale = temp_ref[...] / jnp.maximum(
        jnp.sqrt(jnp.sum(q * q, axis=-1, keepdims=True)), 1e-12)   # (C,1)
    kn_scale = 1.0 / jnp.maximum(
        jnp.sqrt(jnp.sum(k * k, axis=-1, keepdims=True)), 1e-12)   # (C,1)
    qn = q * qn_scale
    kn = k * kn_scale

    # Channel-attention logits for all heads at once: (C, C), confined to each
    # head's diagonal block by the additive mask (no per-head loop / reshape).
    s = jax.lax.dot_general(qn, kn, (((1,), (1,)), ((), ())),
                            preferred_element_type=jnp.float32)    # (C, C)
    s = s + mask_ref[...]

    # Softmax over the last (channel) axis.  Off-block entries become exactly
    # zero, so attn is exactly block-diagonal.
    s = s - jnp.max(s, axis=-1, keepdims=True)
    e = jnp.exp(s)
    attn = e * (1.0 / jnp.sum(e, axis=-1, keepdims=True))          # (C, C)

    # project_out(attn @ v) == (Wproj @ attn) @ v : fold the 1x1 projection
    # into the tiny (C,C) attention matrix, saving a (C,C)x(C,HW) matmul.
    pa = jnp.dot(wproj_ref[...], attn,
                 preferred_element_type=jnp.float32)               # (C, C)
    o_ref[0] = jnp.dot(pa, v,
                       preferred_element_type=jnp.float32).astype(o_ref.dtype)


def attention_forward(x, wqkv, wdw, wproj, temperature, num_heads):
    """Matches PyTorch Attention.forward (bias=False).

    x          : (N, C, H, W)
    wqkv       : (3C, C, 1, 1)   qkv.weight
    wdw        : (3C, 1, 3, 3)   qkv_dwconv.weight (depthwise, groups=3C)
    wproj      : (C, C, 1, 1)    project_out.weight
    temperature: (num_heads, 1, 1)
    """
    N, C, H, W = x.shape
    HW = H * W
    C3 = 3 * C
    ch = C // num_heads

    # --- HBM-side im2col of the 3x3 neighbourhood (zero padding = 1) ------
    xp = jnp.pad(x, ((0, 0), (0, 0), (1, 1), (1, 1)))
    taps = [xp[:, :, i:i + H, j:j + W] for i in range(3) for j in range(3)]
    x9 = jnp.stack(taps, axis=1).reshape(N, 9 * C, HW)        # K index = t*C + c

    # --- fuse (depthwise 3x3) o (qkv 1x1) into one (3C, 9C) weight --------
    w1 = wqkv.reshape(C3, C)                                  # (3C, C)
    d = wdw.reshape(C3, 9)                                    # (3C, 9), t = i*3+j
    wfused = (d[:, :, None] * w1[:, None, :]).reshape(C3, 9 * C)

    # per-row temperature (each head's scalar repeated over its ch rows)
    temp_rows = jnp.repeat(temperature.reshape(num_heads), ch).reshape(C, 1)

    # additive block-diagonal head mask: 0 inside a head's block, -1e30 outside
    hid = jnp.arange(C, dtype=jnp.int32) // ch
    mask = jnp.where(hid[:, None] == hid[None, :], 0.0, -1e30).astype(jnp.float32)

    wp = wproj.reshape(C, C)

    out = pl.pallas_call(
        _attn_kernel,
        out_shape=jax.ShapeDtypeStruct((N, C, HW), x.dtype),
        grid=(N,),
        in_specs=[
            pl.BlockSpec((1, 9 * C, HW), lambda n: (n, 0, 0)),
            pl.BlockSpec((C3, 9 * C), lambda n: (0, 0)),
            pl.BlockSpec((C, 1), lambda n: (0, 0)),
            pl.BlockSpec((C, C), lambda n: (0, 0)),
            pl.BlockSpec((C, C), lambda n: (0, 0)),
        ],
        out_specs=pl.BlockSpec((1, C, HW), lambda n: (n, 0, 0)),
        compiler_params=pltpu.CompilerParams(
            dimension_semantics=("parallel",)),
    )(x9, wfused, temp_rows, mask, wp)

    return out.reshape(N, C, H, W)


def _reference(x, wqkv, wdw, wproj, temperature, num_heads):
    """Pure-JAX reference implementing the PyTorch forward directly."""
    N, C, H, W = x.shape
    hp = jax.lax.Precision.HIGHEST
    dn = ("NCHW", "OIHW", "NCHW")
    qkv = jax.lax.conv_general_dilated(x, wqkv, (1, 1), "VALID",
                                       dimension_numbers=dn, precision=hp)
    qkv = jax.lax.conv_general_dilated(qkv, wdw, (1, 1), ((1, 1), (1, 1)),
                                       dimension_numbers=dn,
                                       feature_group_count=3 * C, precision=hp)
    q, k, v = jnp.split(qkv, 3, axis=1)
    ch = C // num_heads

    def heads(a):
        return a.reshape(N, num_heads, ch, H * W)

    def l2n(a):
        n = jnp.sqrt(jnp.sum(a * a, axis=-1, keepdims=True))
        return a / jnp.maximum(n, 1e-12)

    q, k, v = heads(q), heads(k), heads(v)
    q, k = l2n(q), l2n(k)
    attn = jnp.einsum("bhcp,bhdp->bhcd", q, k, precision=hp) * temperature[None]
    attn = jax.nn.softmax(attn, axis=-1)
    out = jnp.einsum("bhcd,bhdp->bhcp", attn, v, precision=hp)
    out = out.reshape(N, C, H, W)
    out = jax.lax.conv_general_dilated(out, wproj, (1, 1), "VALID",
                                       dimension_numbers=dn, precision=hp)
    return out


if __name__ == "__main__":
    dim, num_heads = 16, 2
    N, H, W = 2, 16, 16

    key = jax.random.PRNGKey(0)
    k1, k2, k3, k4, k5 = jax.random.split(key, 5)
    x = jax.random.normal(k1, (N, dim, H, W), dtype=jnp.float32)
    wqkv = jax.random.normal(k2, (3 * dim, dim, 1, 1), dtype=jnp.float32) * 0.2
    wdw = jax.random.normal(k3, (3 * dim, 1, 3, 3), dtype=jnp.float32) * 0.2
    wproj = jax.random.normal(k4, (dim, dim, 1, 1), dtype=jnp.float32) * 0.2
    temperature = (jnp.ones((num_heads, 1, 1), jnp.float32)
                   + 0.1 * jax.random.normal(k5, (num_heads, 1, 1), jnp.float32))

    fwd = jax.jit(functools.partial(attention_forward, num_heads=num_heads))
    out = fwd(x, wqkv, wdw, wproj, temperature)
    out = jax.block_until_ready(out)

    ref = _reference(x, wqkv, wdw, wproj, temperature, num_heads)
    assert out.shape == (N, dim, H, W), out.shape
    assert jnp.allclose(out, ref, atol=2e-3, rtol=2e-3), \
        float(jnp.max(jnp.abs(out - ref)))

    print("KERNEL_OK")
</pallas_src>

<mosaic_0001>
module attributes {stable_mosaic.version = 11 : i64} {
  func.func @_attn_kernel(%arg0: i32, %arg1: memref<1x144x256xf32, #tpu.memory_space<vmem>>, %arg2: memref<48x144xf32, #tpu.memory_space<vmem>>, %arg3: memref<16x1xf32, #tpu.memory_space<vmem>>, %arg4: memref<16x16xf32, #tpu.memory_space<vmem>>, %arg5: memref<16x16xf32, #tpu.memory_space<vmem>>, %arg6: memref<1x16x256xf32, #tpu.memory_space<vmem>>) attributes {dimension_semantics = [#tpu.dimension_semantics<parallel>], iteration_bounds = array<i64: 2>, scalar_prefetch = 0 : i64, scratch_operands = 0 : i64, tpu.core_type = #tpu.core_type<tc>, window_params = [{transform_indices = @transform_0, window_bounds = array<i64: 1, 144, 256>}, {pipeline_mode = #tpu.pipeline_mode<synchronous>, transform_indices = @transform_1, window_bounds = array<i64: 48, 144>}, {pipeline_mode = #tpu.pipeline_mode<synchronous>, transform_indices = @transform_2, window_bounds = array<i64: 16, 1>}, {pipeline_mode = #tpu.pipeline_mode<synchronous>, transform_indices = @transform_3, window_bounds = array<i64: 16, 16>}, {pipeline_mode = #tpu.pipeline_mode<synchronous>, transform_indices = @transform_4, window_bounds = array<i64: 16, 16>}, {transform_indices = @transform_5, window_bounds = array<i64: 1, 16, 256>}]} {
    %c0 = arith.constant 0 : index
    %c0_0 = arith.constant 0 : index
    %c0_1 = arith.constant 0 : index
    %0 = vector.load %arg1[%c0, %c0_0, %c0_1] : memref<1x144x256xf32, #tpu.memory_space<vmem>>, vector<1x144x256xf32>
    %1 = vector.shape_cast %0 : vector<1x144x256xf32> to vector<144x256xf32>
    %c0_2 = arith.constant 0 : index
    %c0_3 = arith.constant 0 : index
    %2 = vector.load %arg2[%c0_2, %c0_3] : memref<48x144xf32, #tpu.memory_space<vmem>>, vector<48x144xf32>
    %cst = arith.constant dense<0.000000e+00> : vector<48x256xf32>
    %3 = tpu.matmul %2, %1, %cst {dimension_numbers = #tpu.dot_dimension_numbers<[1], [0], [0], [1], [0, 0, 1, 1], [], []>} : vector<48x144xf32>, vector<144x256xf32>, vector<48x256xf32> -> vector<48x256xf32>
    %4 = vector.extract_strided_slice %3 {offsets = [0, 0], sizes = [16, 256], strides = [1, 1]} : vector<48x256xf32> to vector<16x256xf32>
    %5 = vector.extract_strided_slice %3 {offsets = [16, 0], sizes = [16, 256], strides = [1, 1]} : vector<48x256xf32> to vector<16x256xf32>
    %6 = vector.extract_strided_slice %3 {offsets = [32, 0], sizes = [16, 256], strides = [1, 1]} : vector<48x256xf32> to vector<16x256xf32>
    %c0_4 = arith.constant 0 : index
    %c0_5 = arith.constant 0 : index
    %7 = vector.load %arg3[%c0_4, %c0_5] : memref<16x1xf32, #tpu.memory_space<vmem>>, vector<16x1xf32>
    %8 = arith.mulf %4, %4 : vector<16x256xf32>
    %cst_6 = arith.constant dense<0.000000e+00> : vector<16xf32>
    %9 = vector.multi_reduction <add>, %8, %cst_6 [1] : vector<16x256xf32> to vector<16xf32>
    %10 = vector.shape_cast %9 : vector<16xf32> to vector<16x1xf32>
    %11 = math.sqrt %10 : vector<16x1xf32>
    %cst_7 = arith.constant 9.99999996E-13 : f32
    %12 = vector.broadcast %cst_7 : f32 to vector<16x1xf32>
    %13 = arith.maximumf %11, %12 : vector<16x1xf32>
    %14 = arith.divf %7, %13 : vector<16x1xf32>
    %15 = arith.mulf %5, %5 : vector<16x256xf32>
    %cst_8 = arith.constant dense<0.000000e+00> : vector<16xf32>
    %16 = vector.multi_reduction <add>, %15, %cst_8 [1] : vector<16x256xf32> to vector<16xf32>
    %17 = vector.shape_cast %16 : vector<16xf32> to vector<16x1xf32>
    %18 = math.sqrt %17 : vector<16x1xf32>
    %cst_9 = arith.constant 9.99999996E-13 : f32
    %19 = vector.broadcast %cst_9 : f32 to vector<16x1xf32>
    %20 = arith.maximumf %18, %19 : vector<16x1xf32>
    %cst_10 = arith.constant 1.000000e+00 : f32
    %21 = vector.broadcast %cst_10 : f32 to vector<16x1xf32>
    %22 = arith.divf %21, %20 : vector<16x1xf32>
    %23 = vector.broadcast %14 : vector<16x1xf32> to vector<16x256xf32>
    %24 = arith.mulf %4, %23 : vector<16x256xf32>
    %25 = vector.broadcast %22 : vector<16x1xf32> to vector<16x256xf32>
    %26 = arith.mulf %5, %25 : vector<16x256xf32>
    %cst_11 = arith.constant dense<0.000000e+00> : vector<16x16xf32>
    %27 = tpu.matmul %24, %26, %cst_11 {dimension_numbers = #tpu.dot_dimension_numbers<[1], [1], [0], [0], [0, 0, 1, 0], [], []>} : vector<16x256xf32>, vector<16x256xf32>, vector<16x16xf32> -> vector<16x16xf32>
    %c0_12 = arith.constant 0 : index
    %c0_13 = arith.constant 0 : index
    %28 = vector.load %arg4[%c0_12, %c0_13] : memref<16x16xf32, #tpu.memory_space<vmem>>, vector<16x16xf32>
    %29 = arith.addf %27, %28 : vector<16x16xf32>
    %cst_14 = arith.constant dense<0xFF800000> : vector<16xf32>
    %30 = vector.multi_reduction <maximumf>, %29, %cst_14 [1] : vector<16x16xf32> to vector<16xf32>
    %31 = vector.shape_cast %30 : vector<16xf32> to vector<16x1xf32>
    %32 = vector.broadcast %31 : vector<16x1xf32> to vector<16x16xf32>
    %33 = arith.subf %29, %32 : vector<16x16xf32>
    %34 = math.exp %33 : vector<16x16xf32>
    %cst_15 = arith.constant dense<0.000000e+00> : vector<16xf32>
    %35 = vector.multi_reduction <add>, %34, %cst_15 [1] : vector<16x16xf32> to vector<16xf32>
    %36 = vector.shape_cast %35 : vector<16xf32> to vector<16x1xf32>
    %cst_16 = arith.constant 1.000000e+00 : f32
    %37 = vector.broadcast %cst_16 : f32 to vector<16x1xf32>
    %38 = arith.divf %37, %36 : vector<16x1xf32>
    %39 = vector.broadcast %38 : vector<16x1xf32> to vector<16x16xf32>
    %40 = arith.mulf %34, %39 : vector<16x16xf32>
    %c0_17 = arith.constant 0 : index
    %c0_18 = arith.constant 0 : index
    %41 = vector.load %arg5[%c0_17, %c0_18] : memref<16x16xf32, #tpu.memory_space<vmem>>, vector<16x16xf32>
    %cst_19 = arith.constant dense<0.000000e+00> : vector<16x16xf32>
    %42 = tpu.matmul %41, %40, %cst_19 {dimension_numbers = #tpu.dot_dimension_numbers<[1], [0], [0], [1], [0, 0, 1, 1], [], []>} : vector<16x16xf32>, vector<16x16xf32>, vector<16x16xf32> -> vector<16x16xf32>
    %cst_20 = arith.constant dense<0.000000e+00> : vector<16x256xf32>
    %43 = tpu.matmul %42, %6, %cst_20 {dimension_numbers = #tpu.dot_dimension_numbers<[1], [0], [0], [1], [0, 0, 1, 1], [], []>} : vector<16x16xf32>, vector<16x256xf32>, vector<16x256xf32> -> vector<16x256xf32>
    %c0_21 = arith.constant 0 : index
    %c0_22 = arith.constant 0 : index
    %c0_23 = arith.constant 0 : index
    %44 = vector.load %arg6[%c0_21, %c0_22, %c0_23] : memref<1x16x256xf32, #tpu.memory_space<vmem>>, vector<1x16x256xf32>
    %45 = vector.shape_cast %44 : vector<1x16x256xf32> to vector<16x256xf32>
    %46 = vector.shape_cast %43 : vector<16x256xf32> to vector<1x16x256xf32>
    tpu.vector_store %arg6[%c0_21, %c0_22, %c0_23], %46 {strides = array<i32>} : memref<1x16x256xf32, #tpu.memory_space<vmem>>, vector<1x16x256xf32>,
    return
  }
  func.func @transform_0(%arg0: i32) -> (i32, i32, i32) {
    %c0_i32 = arith.constant 0 : i32
    %c0_i32_0 = arith.constant 0 : i32
    %c0_i32_1 = arith.constant 0 : i32
    return %arg0, %c0_i32, %c0_i32_0 : i32, i32, i32
  }
  func.func @transform_1(%arg0: i32) -> (i32, i32) {
    %c0_i32 = arith.constant 0 : i32
    %c0_i32_0 = arith.constant 0 : i32
    %c0_i32_1 = arith.constant 0 : i32
    return %c0_i32, %c0_i32_0 : i32, i32
  }
  func.func @transform_2(%arg0: i32) -> (i32, i32) {
    %c0_i32 = arith.constant 0 : i32
    %c0_i32_0 = arith.constant 0 : i32
    %c0_i32_1 = arith.constant 0 : i32
    return %c0_i32, %c0_i32_0 : i32, i32
  }
  func.func @transform_3(%arg0: i32) -> (i32, i32) {
    %c0_i32 = arith.constant 0 : i32
    %c0_i32_0 = arith.constant 0 : i32
    %c0_i32_1 = arith.constant 0 : i32
    return %c0_i32, %c0_i32_0 : i32, i32
  }
  func.func @transform_4(%arg0: i32) -> (i32, i32) {
    %c0_i32 = arith.constant 0 : i32
    %c0_i32_0 = arith.constant 0 : i32
    %c0_i32_1 = arith.constant 0 : i32
    return %c0_i32, %c0_i32_0 : i32, i32
  }
  func.func @transform_5(%arg0: i32) -> (i32, i32, i32) {
    %c0_i32 = arith.constant 0 : i32
    %c0_i32_0 = arith.constant 0 : i32
    %c0_i32_1 = arith.constant 0 : i32
    return %arg0, %c0_i32, %c0_i32_0 : i32, i32, i32
  }
}

</mosaic_0001>

<llo_original>
// kernel: mul.8
$region0: #{mul.8}
  %s0 = inlined_call_operand.vmem [shape: f32[48,3,3], index: 0, kind: input, shape index: {}]
  %s1 = inlined_call_operand.vmem [shape: f32[48,9], index: 1, kind: output, shape index: {}]
  $region1: #{mul.8} parent=0
    #allocation0 [shape = 'u8[12288]{0}', space=vmem, size = 0x3000, scoped, tag = 'scoped mem for input reshape']
    %s3 = sshllo.u32 0, 4
    %s4 = smul.addr 4, 2
    %s5 = scalar_lea.vmem %s0, %s4
    %v6 = vld [vmem:[%s5] sm:%s3]
    %s7 = scalar_lea.vmem [#allocation0], 16
    %8 = vst [vmem:[%s7] sm:%s3] %v6
    %s9 = scalar_lea.vmem %s0, 4
    %v10 = vld [vmem:[%s9] sm:%s3]
    %s11 = scalar_lea.vmem [#allocation0], 8
    %12 = vst [vmem:[%s11] sm:%s3] %v10
    %v13 = vld [vmem:[%s0] sm:%s3]
    %14 = vst [vmem:[#allocation0] sm:%s3] %v13
    %v15 = vld [vmem:[#allocation0] sm:$0x7]
    %vm16 = vcmask 392192
    %17 = vst.msk [vmem:[%s1] sm:$0x7] %vm16, %v15
    %s18 = scalar_lea.vmem [#allocation0], 8
    %v19 = vld [vmem:[%s18] sm:$0x7]
    %vm20 = vcmask 392192
    %s21 = scalar_lea.vmem %s1, 3
    %22 = vst.msk [vmem:[%s21] sm:$0x7] %vm20, %v19
    %s23 = scalar_lea.vmem [#allocation0], 16
    %v24 = vld [vmem:[%s23] sm:$0x7]
    %vm25 = vcmask 392192
    %s26 = scalar_lea.vmem %s1, 6
    %27 = vst.msk [vmem:[%s26] sm:$0x7] %vm25, %v24

// kernel: attention_forward.1
$region0: #{attention_forward.1}
  #allocation0 [shape = 'u32[]', space=smem, size = 0x4, offset = 0x4, fixed_abs, tag = 'smem constant byte address 0x4 - core index']
  #allocation1 [shape = 'u32[144,128]{1,0:T(1,128)}', space=vmem, size = 0x12000, scoped, tag = 'internal scratch']
  %s0 = inlined_call_operand.vmem [shape: f32[2,144,256], index: 0, kind: input, shape index: {}]
  %s1 = inlined_call_operand.vmem [shape: f32[48,144], index: 1, kind: input, shape index: {}]
  %s2 = inlined_call_operand.vmem [shape: f32[16,1], index: 2, kind: input, shape index: {}]
  %s3 = inlined_call_operand.vmem [shape: f32[16,16], index: 3, kind: input, shape index: {}]
  %s4 = inlined_call_operand.vmem [shape: f32[16,16], index: 4, kind: input, shape index: {}]
  %s5 = inlined_call_operand.vmem [shape: f32[2,16,256], index: 5, kind: output, shape index: {}]
  %s6 = sld [smem:[#allocation0]]
  $region53: #{attention_forward.1} parent=0
    _
  %s8 = ssub.s32 1, %s6
  %s9 = scalar_select 0, %s8, %s6
  loop: start=0, step=1, limit=4
  $region2: #{attention_forward.1} parent=0 // loop_pre_header
    _
  $region3: #{attention_forward.1} parent=0 // loop_header
    %s11 = sphi 0, %s15
    %p12 = scmp.ge.s32.totalorder %s11, 4
    %s21 = sphi 0, %s23
    %s24 = sphi 0, %s21
    %s25 = sphi 0, %s24
    %s41 = sphi 0, %s25
    %s45 = sphi 0, %s45
    %s47 = sphi 0, %s45
    %s48 = sphi 0, %s47
    %s62 = sphi 0, %s48
    %s66 = sphi 0, %s66
    %s68 = sphi 0, %s66
    %s69 = sphi 0, %s68
    %s83 = sphi 0, %s69
    %s87 = sphi 0, %s87
    %s89 = sphi 0, %s87
    %s90 = sphi 0, %s89
    %s104 = sphi 0, %s90
    %s108 = sphi 0, %s108
    %s110 = sphi 0, %s108
    %s111 = sphi 0, %s110
    %s125 = sphi 0, %s111
    %s131 = sphi 0, %s133
    %s134 = sphi 0, %s131
    %s135 = sphi 0, %s134
    %s151 = sphi 0, %s135
  $region4: #{attention_forward.1} parent=0 // loop_header_branch
    %14 = sbr.rel (%p12) target = $region8
  $region5: #{attention_forward.1} parent=0 // loop_body
    %s16 = ssub.s32 %s11, 1
    %s17 = ssub.s32 %s11, 2
    %s18 = sadd.s32 %s11, 1
    %s19 = ssub.s32 %s11, %s18
    %p20 = scmp.eq.s32.totalorder %s19, 0
    %s22 = sadd.s32 %s21, 1
    %s23 = scalar_select %p20, %s21, %s22
    %p26 = pneg %p20
    %p27 = scmp.eq.s32.totalorder %s11, 1
    %p28 = por %p26, %p27
    %p29 = scmp.ne.s32.totalorder %s21, %s24
    %p30 = scmp.eq.s32.totalorder %s11, 0
    %p31 = por %p29, %p30
    %p32 = scmp.ne.s32.totalorder %s21, %s24
    %p33 = scmp.eq.s32.totalorder %s16, 1
    %p34 = por %p32, %p33
    %p35 = scmp.ne.s32.totalorder %s24, %s25
    %p36 = scmp.eq.s32.totalorder %s16, 0
    %p37 = por %p35, %p36
    %p38 = scmp.ne.s32.totalorder %s24, %s25
    %p39 = scmp.eq.s32.totalorder %s17, 1
    %p40 = por %p38, %p39
    %p42 = scmp.ne.s32.totalorder %s25, %s41
    %p43 = scmp.eq.s32.totalorder %s17, 0
    %p44 = por %p42, %p43
    %s46 = sadd.s32 %s45, 1
    %p49 = scmp.eq.s32.totalorder %s11, 1
    %p50 = scmp.ne.s32.totalorder %s45, %s47
    %p51 = scmp.eq.s32.totalorder %s11, 0
    %p52 = por %p50, %p51
    %p53 = scmp.ne.s32.totalorder %s45, %s47
    %p54 = scmp.eq.s32.totalorder %s16, 1
    %p55 = por %p53, %p54
    %p56 = scmp.ne.s32.totalorder %s47, %s48
    %p57 = scmp.eq.s32.totalorder %s16, 0
    %p58 = por %p56, %p57
    %p59 = scmp.ne.s32.totalorder %s47, %s48
    %p60 = scmp.eq.s32.totalorder %s17, 1
    %p61 = por %p59, %p60
    %p63 = scmp.ne.s32.totalorder %s48, %s62
    %p64 = scmp.eq.s32.totalorder %s17, 0
    %p65 = por %p63, %p64
    %s67 = sadd.s32 %s66, 1
    %p70 = scmp.eq.s32.totalorder %s11, 1
    %p71 = scmp.ne.s32.totalorder %s66, %s68
    %p72 = scmp.eq.s32.totalorder %s11, 0
    %p73 = por %p71, %p72
    %p74 = scmp.ne.s32.totalorder %s66, %s68
    %p75 = scmp.eq.s32.totalorder %s16, 1
    %p76 = por %p74, %p75
    %p77 = scmp.ne.s32.totalorder %s68, %s69
    %p78 = scmp.eq.s32.totalorder %s16, 0
    %p79 = por %p77, %p78
    %p80 = scmp.ne.s32.totalorder %s68, %s69
    %p81 = scmp.eq.s32.totalorder %s17, 1
    %p82 = por %p80, %p81
    %p84 = scmp.ne.s32.totalorder %s69, %s83
    %p85 = scmp.eq.s32.totalorder %s17, 0
    %p86 = por %p84, %p85
    %s88 = sadd.s32 %s87, 1
    %p91 = scmp.eq.s32.totalorder %s11, 1
    %p92 = scmp.ne.s32.totalorder %s87, %s89
    %p93 = scmp.eq.s32.totalorder %s11, 0
    %p94 = por %p92, %p93
    %p95 = scmp.ne.s32.totalorder %s87, %s89
    %p96 = scmp.eq.s32.totalorder %s16, 1
    %p97 = por %p95, %p96
    %p98 = scmp.ne.s32.totalorder %s89, %s90
    %p99 = scmp.eq.s32.totalorder %s16, 0
    %p100 = por %p98, %p99
    %p101 = scmp.ne.s32.totalorder %s89, %s90
    %p102 = scmp.eq.s32.totalorder %s17, 1
    %p103 = por %p101, %p102
    %p105 = scmp.ne.s32.totalorder %s90, %s104
    %p106 = scmp.eq.s32.totalorder %s17, 0
    %p107 = por %p105, %p106
    %s109 = sadd.s32 %s108, 1
    %p112 = scmp.eq.s32.totalorder %s11, 1
    %p113 = scmp.ne.s32.totalorder %s108, %s110
    %p114 = scmp.eq.s32.totalorder %s11, 0
    %p115 = por %p113, %p114
    %p116 = scmp.ne.s32.totalorder %s108, %s110
    %p117 = scmp.eq.s32.totalorder %s16, 1
    %p118 = por %p116, %p117
    %p119 = scmp.ne.s32.totalorder %s110, %s111
    %p120 = scmp.eq.s32.totalorder %s16, 0
    %p121 = por %p119, %p120
    %p122 = scmp.ne.s32.totalorder %s110, %s111
    %p123 = scmp.eq.s32.totalorder %s17, 1
    %p124 = por %p122, %p123
    %p126 = scmp.ne.s32.totalorder %s111, %s125
    %p127 = scmp.eq.s32.totalorder %s17, 0
    %p128 = por %p126, %p127
    %s129 = ssub.s32 %s11, %s18
    %p130 = scmp.eq.s32.totalorder %s129, 0
    %s132 = sadd.s32 %s131, 1
    %s133 = scalar_select %p130, %s131, %s132
    %p136 = pneg %p130
    %p137 = scmp.eq.s32.totalorder %s11, 1
    %p138 = por %p136, %p137
    %p139 = scmp.ne.s32.totalorder %s131, %s134
    %p140 = scmp.eq.s32.totalorder %s11, 0
    %p141 = por %p139, %p140
    %p142 = scmp.ne.s32.totalorder %s131, %s134
    %p143 = scmp.eq.s32.totalorder %s16, 1
    %p144 = por %p142, %p143
    %p145 = scmp.ne.s32.totalorder %s134, %s135
    %p146 = scmp.eq.s32.totalorder %s16, 0
    %p147 = por %p145, %p146
    %p148 = scmp.ne.s32.totalorder %s134, %s135
    %p149 = scmp.eq.s32.totalorder %s17, 1
    %p150 = por %p148, %p149
    %p152 = scmp.ne.s32.totalorder %s135, %s151
    %p153 = scmp.eq.s32.totalorder %s17, 0
    %p154 = por %p152, %p153
    %p155 = scmp.le.s32.totalorder 1, %s11
    %p156 = scmp.lt.s32.totalorder %s11, 3
    %p157 = pnand %p155, %p156
    %p158 = pneg %p157
    // Predicated region
    $region9: #{attention_forward.1} parent=5 // pred_check
      _
    $region10: #{attention_forward.1} parent=5 // pred_check_branch
      %160 = sbr.rel (%p157) target = $region12
    $region11: #{attention_forward.1} parent=5 // pred_region
      %s161 = ssub.s32 %s11, 1
      // Predicated region
      $region13: #{attention_forward.1} parent=11 // pred_check
        %p162 = pneg %p58
      $region14: #{attention_forward.1} parent=11 // pred_check_branch
        %164 = sbr.rel (%p162) target = $region16
      $region15: #{attention_forward.1} parent=11 // pred_region
        _
      $region16: #{attention_forward.1} parent=11 // pred_fallthru
        _
      // Predicated region
      $region17: #{attention_forward.1} parent=11 // pred_check
        %p165 = pneg %p79
      $region18: #{attention_forward.1} parent=11 // pred_check_branch
        %167 = sbr.rel (%p165) target = $region20
      $region19: #{attention_forward.1} parent=11 // pred_region
        _
      $region20: #{attention_forward.1} parent=11 // pred_fallthru
        _
      // Predicated region
      $region21: #{attention_forward.1} parent=11 // pred_check
        %p168 = pneg %p100
      $region22: #{attention_forward.1} parent=11 // pred_check_branch
        %170 = sbr.rel (%p168) target = $region24
      $region23: #{attention_forward.1} parent=11 // pred_region
        _
      $region24: #{attention_forward.1} parent=11 // pred_fallthru
        _
      // Predicated region
      $region25: #{attention_forward.1} parent=11 // pred_check
        %p171 = pneg %p121
      $region26: #{attention_forward.1} parent=11 // pred_check_branch
        %173 = sbr.rel (%p171) target = $region28
      $region27: #{attention_forward.1} parent=11 // pred_region
        _
      $region28: #{attention_forward.1} parent=11 // pred_fallthru
        _
    $region12: #{attention_forward.1} parent=5 // pred_fallthru
      _
    %p174 = scmp.lt.s32.totalorder %s11, 2
    // Predicated region
    $region29: #{attention_forward.1} parent=5 // pred_check
      %p175 = pneg %p174
    $region30: #{attention_forward.1} parent=5 // pred_check_branch
      %177 = sbr.rel (%p175) target = $region32
    $region31: #{attention_forward.1} parent=5 // pred_region
      // Predicated region
      $region33: #{attention_forward.1} parent=31 // pred_check
        %p178 = pneg %p31
      $region34: #{attention_forward.1} parent=31 // pred_check_branch
        %180 = sbr.rel (%p178) target = $region36
      $region35: #{attention_forward.1} parent=31 // pred_region
        %p181 = scmp.lt.s32.totalorder %s11, 1
        %s182 = scalar_select %p181, %s11, 1
        %s183 = smul.addr %s182, 36
        %s184 = smul.addr %s183, 8
        %s185 = scalar_lea.vmem %s0, %s184
      $region36: #{attention_forward.1} parent=31 // pred_fallthru
        _
    $region32: #{attention_forward.1} parent=5 // pred_fallthru
      _
    %p186 = scmp.le.s32.totalorder 1, %s11
    %p187 = scmp.lt.s32.totalorder %s11, 3
    %p188 = pnand %p186, %p187
    %p189 = pneg %p188
    // Predicated region
    $region37: #{attention_forward.1} parent=5 // pred_check
      _
    $region38: #{attention_forward.1} parent=5 // pred_check_branch
      %191 = sbr.rel (%p188) target = $region40
    $region39: #{attention_forward.1} parent=5 // pred_region
      %s192 = ssub.s32 %s11, 1
      %p193 = scmp.lt.s32.totalorder %s16, 1
      %s194 = scalar_select %p193, %s16, 1
      %s195 = smul.addr %s194, 36
      %s196 = smul.addr %s195, 8
      %s197 = scalar_lea.vmem %s0, %s196
      %p198 = pneg %p37
      %p199 = pneg %p34
      %p200 = pneg %p58
      %p201 = pneg %p55
      %p202 = pneg %p79
      %p203 = pneg %p76
      %p204 = pneg %p100
      %p205 = pneg %p97
      %p206 = pneg %p121
      %p207 = pneg %p118
      %p208 = pneg %p147
      %p209 = pneg %p144
      %p210 = scmp.lt.s32.totalorder %s16, 1
      %s211 = scalar_select %p210, %s16, 1
      %s212 = smul.addr %s211, 4
      %s213 = smul.addr %s212, 8
      %s214 = scalar_lea.vmem %s5, %s213
      %p215 = scmp.lt.s32.totalorder %s16, 1
      %s216 = scalar_select %p215, %s16, 1
      %s217 = smul.addr %s216, 36
      %s218 = smul.addr %s217, 8
      %s219 = scalar_lea.vmem %s0, %s218
      %p220 = scmp.lt.s32.totalorder %s16, 1
      %s221 = scalar_select %p220, %s16, 1
      %s222 = smul.addr %s221, 4
      %s223 = smul.addr %s222, 8
      %s224 = scalar_lea.vmem %s5, %s223
      %v225 = vld [vmem:[%s219] sm:$0xff]
      %v226 = vld [vmem:[%s219 + $0x8] sm:$0xff]
      %v227 = vld [vmem:[%s219 + $0x10] sm:$0xff]
      %v228 = vld [vmem:[%s219 + $0x18] sm:$0xff]
      %v229 = vld [vmem:[%s219 + $0x20] sm:$0xff]
      %v230 = vld [vmem:[%s219 + $0x28] sm:$0xff]
      %v231 = vld [vmem:[%s219 + $0x30] sm:$0xff]
      %v232 = vld [vmem:[%s219 + $0x38] sm:$0xff]
      %v233 = vld [vmem:[%s219 + $0x40] sm:$0xff]
      %v234 = vld [vmem:[%s219 + $0x48] sm:$0xff]
      %v235 = vld [vmem:[%s219 + $0x50] sm:$0xff]
      %v236 = vld [vmem:[%s219 + $0x58] sm:$0xff]
      %v237 = vld [vmem:[%s219 + $0x60] sm:$0xff]
      %v238 = vld [vmem:[%s219 + $0x68] sm:$0xff]
      %v239 = vld [vmem:[%s219 + $0x70] sm:$0xff]
      %v240 = vld [vmem:[%s219 + $0x78] sm:$0xff]
      %v241 = vld [vmem:[%s219 + $0x80] sm:$0xff]
      %v242 = vld [vmem:[%s219 + $0x88] sm:$0xff]
      %v243 = vld [vmem:[%s219 + $0x90] sm:$0xff]
      %v244 = vld [vmem:[%s219 + $0x98] sm:$0xff]
      %v245 = vld [vmem:[%s219 + $0xa0] sm:$0xff]
      %v246 = vld [vmem:[%s219 + $0xa8] sm:$0xff]
      %v247 = vld [vmem:[%s219 + $0xb0] sm:$0xff]
      %v248 = vld [vmem:[%s219 + $0xb8] sm:$0xff]
      %v249 = vld [vmem:[%s219 + $0xc0] sm:$0xff]
      %v250 = vld [vmem:[%s219 + $0xc8] sm:$0xff]
      %v251 = vld [vmem:[%s219 + $0xd0] sm:$0xff]
      %v252 = vld [vmem:[%s219 + $0xd8] sm:$0xff]
      %v253 = vld [vmem:[%s219 + $0xe0] sm:$0xff]
      %v254 = vld [vmem:[%s219 + $0xe8] sm:$0xff]
      %v255 = vld [vmem:[%s219 + $0xf0] sm:$0xff]
      %v256 = vld [vmem:[%s219 + $0xf8] sm:$0xff]
      %v257 = vld [vmem:[%s219 + $0x100] sm:$0xff]
      %v258 = vld [vmem:[%s219 + $0x108] sm:$0xff]
      %v259 = vld [vmem:[%s219 + $0x110] sm:$0xff]
      %v260 = vld [vmem:[%s219 + $0x118] sm:$0xff]
      %v261 = vld [vmem:[%s1] sm:$0xff]
      %v262 = vld [vmem:[%s1 + $0x8] sm:$0xff]
      %v263 = vld [vmem:[%s1 + $0x10] sm:$0xff]
      %v264 = vld [vmem:[%s1 + $0x18] sm:$0xff]
      %v265 = vld [vmem:[%s1 + $0x20] sm:$0xff]
      %v266 = vld [vmem:[%s1 + $0x28] sm:$0xff]
      %v267 = vld [vmem:[%s1 + $0x30] sm:$0xff]
      %v268 = vld [vmem:[%s1 + $0x38] sm:$0xff]
      %v269 = vld [vmem:[%s1 + $0x40] sm:$0xff]
      %v270 = vld [vmem:[%s1 + $0x48] sm:$0xff]
      %v271 = vld [vmem:[%s1 + $0x50] sm:$0xff]
      %v272 = vld [vmem:[%s1 + $0x58] sm:$0xff]
      %vm273 = vcmask 130048
      %v275 = vsel %vm273, %v262, 0
      %v278 = vsel %vm273, %v264, 0
      %v281 = vsel %vm273, %v266, 0
      %v284 = vsel %vm273, %v268, 0
      %v287 = vsel %vm273, %v270, 0
      %v290 = vsel %vm273, %v272, 0
      %292 = vmatprep.subr.mxu0 %v226
      %293 = vmatpush1.msra.mxu0 %v225
      %294 = vmatprep.subr.mxu0 %v228
      %295 = vmatpush1.msra.mxu0 %v227
      %296 = vmatprep.subr.mxu0 %v230
      %297 = vmatpush1.msra.mxu0 %v229
      %298 = vmatprep.subr.mxu0 %v232
      %299 = vmatpush1.msra.mxu0 %v231
      %300 = vmatprep.subr.mxu0 %v234
      %301 = vmatpush1.msra.mxu0 %v233
      %302 = vmatprep.subr.mxu0 %v236
      %303 = vmatpush1.msra.mxu0 %v235
      %304 = vmatprep.subr.mxu0 %v238
      %305 = vmatpush1.msra.mxu0 %v237
      %306 = vmatprep.subr.mxu0 %v240
      %307 = vmatpush1.msra.mxu0 %v239
      %308 = vmatprep.subr.mxu0 %v242
      %309 = vmatpush1.msra.mxu0 %v241
      %310 = vmatprep.subr.mxu0 %v244
      %311 = vmatpush1.msra.mxu0 %v243
      %312 = vmatprep.subr.mxu0 %v246
      %313 = vmatpush1.msra.mxu0 %v245
      %314 = vmatprep.subr.mxu0 %v248
      %315 = vmatpush1.msra.mxu0 %v247
      %316 = vmatprep.subr.mxu0 %v250
      %317 = vmatpush1.msra.mxu0 %v249
      %318 = vmatprep.subr.mxu0 %v252
      %319 = vmatpush1.msra.mxu0 %v251
      %320 = vmatprep.subr.mxu0 %v254
      %321 = vmatpush1.msra.mxu0 %v253
      %322 = vmatprep.subr.mxu0 %v256
      %323 = vmatpush1.msra.mxu0 %v255
      %324 = vmatprep.subr.mxu0 %v258
      %325 = vmatpush1.msra.mxu0 %v257
      %326 = vmatprep.subr.mxu0 %v260
      %327 = vmatpush1.msra.mxu0 %v259
      %328 = vmatprep.subr.mxu0 0.0
      %329 = vmatpush1.msra.mxu0 0.0
      %330 = vmatprep.subr.mxu0 0.0
      %331 = vmatpush1.msra.mxu0 0.0
      %332 = vmatprep.subr.mxu0 0.0
      %333 = vmatpush1.msra.mxu0 0.0
      %334 = vmatprep.subr.mxu0 0.0
      %335 = vmatpush1.msra.mxu0 0.0
      %336 = vmatprep.subr.mxu0 0.0
      %337 = vmatpush1.msra.mxu0 0.0
      %338 = vmatprep.subr.mxu0 0.0
      %339 = vmatpush1.msra.mxu0 0.0
      %340 = vmatprep.subr.mxu0 0.0
      %341 = vmatpush1.msra.mxu0 0.0
      %342 = vmatprep.subr.mxu0 0.0
      %343 = vmatpush1.msra.mxu0 0.0
      %344 = vmatprep.subr.mxu0 0.0
      %345 = vmatpush1.msra.mxu0 0.0
      %346 = vmatprep.subr.mxu0 0.0
      %347 = vmatpush1.msra.mxu0 0.0
      %348 = vmatprep.subr.mxu0 0.0
      %349 = vmatpush1.msra.mxu0 0.0
      %350 = vmatprep.subr.mxu0 0.0
      %351 = vmatpush1.msra.mxu0 0.0
      %352 = vmatprep.subr.mxu0 0.0
      %353 = vmatpush1.msra.mxu0 0.0
      %354 = vmatprep.subr.mxu0 0.0
      %355 = vmatpush1.msra.mxu0 0.0
      %356 = vmatprep.mubr.f32.mxu0 %v275
      %357 = vmatmul.mubr.f32.gmra.mrb[0].mxu0 %v261
      %v358 = vpop.f32.mrb[0].mxu0
      %v359 = vadd.f32 0.0, %v358
      %v360 = vpop.f32.mrb[0].mxu0
      %v361 = vadd.f32 0.0, %v360
      %362 = vmatprep.mubr.f32.mxu0 %v278
      %363 = vmatmul.mubr.f32.gmra.mrb[0].mxu0 %v263
      %v364 = vpop.f32.mrb[0].mxu0
      %v365 = vadd.f32 0.0, %v364
      %v366 = vpop.f32.mrb[0].mxu0
      %v367 = vadd.f32 0.0, %v366
      %368 = vmatprep.mubr.f32.mxu0 %v281
      %369 = vmatmul.mubr.f32.gmra.mrb[0].mxu0 %v265
      %v370 = vpop.f32.mrb[0].mxu0
      %v371 = vadd.f32 0.0, %v370
      %v372 = vpop.f32.mrb[0].mxu0
      %v373 = vadd.f32 0.0, %v372
      %374 = vmatprep.mubr.f32.mxu0 %v284
      %375 = vmatmul.mubr.f32.gmra.mrb[0].mxu0 %v267
      %v376 = vpop.f32.mrb[0].mxu0
      %v377 = vadd.f32 0.0, %v376
      %v378 = vpop.f32.mrb[0].mxu0
      %v379 = vadd.f32 0.0, %v378
      %380 = vmatprep.mubr.f32.mxu0 %v287
      %381 = vmatmul.mubr.f32.gmra.mrb[0].mxu0 %v269
      %v382 = vpop.f32.mrb[0].mxu0
      %v383 = vadd.f32 0.0, %v382
      %v384 = vpop.f32.mrb[0].mxu0
      %v385 = vadd.f32 0.0, %v384
      %386 = vmatprep.mubr.f32.mxu0 %v290
      %387 = vmatmul.mubr.f32.gmra.mrb[0].mxu0 %v271
      %v388 = vpop.f32.mrb[0].mxu0
      %v389 = vadd.f32 0.0, %v388
      %v390 = vpop.f32.mrb[0].mxu0
      %v391 = vadd.f32 0.0, %v390
      %392 = vdwg.mxu0
      %v393 = vld [vmem:[%s2] sm:$0xff]
      %v394 = vld [vmem:[%s2 + $0x8] sm:$0xff]
      %v395 = vmul.f32 %v359, %v359
      %v396 = vmul.f32 %v361, %v361
      %v397 = vmul.f32 %v365, %v365
      %v398 = vmul.f32 %v367, %v367
      %v399 = vadd.f32 %v395, %v396
      %400 = vadd.xlane.f32.xlu0 %v399
      %v401 = vpop.xlane.xlu0 %400
      %v402 = vadd.f32 %v397, %v398
      %403 = vadd.xlane.f32.xlu0 %v402
      %v404 = vpop.xlane.xlu0 %403
      %v405 = vrsqrt.pop %v401
      %v406 = vmul.f32 %v401, %v405
      %vm407 = vcmp.eq.f32.partialorder %v401, inf
      %v408 = vsel %vm407, %v401, %v406
      %vm409 = vcmp.eq.f32.partialorder %v401, 0.0
      %v410 = vand.u32 %v401, 2147483648
      %v411 = vsel %vm409, %v410, %v408
      %v412 = vrsqrt.pop %v404
      %v413 = vmul.f32 %v404, %v412
      %vm414 = vcmp.eq.f32.partialorder %v404, inf
      %v415 = vsel %vm414, %v404, %v413
      %vm416 = vcmp.eq.f32.partialorder %v404, 0.0
      %v417 = vand.u32 %v404, 2147483648
      %v418 = vsel %vm416, %v417, %v415
      %v419 = vmax.f32 %v411, 1e-12
      %v420 = vmax.f32 %v418, 1e-12
      %v421 = vrcp.pop %v419
      %v422 = vmul.f32 %v393, %v421
      %v423 = vrcp.pop %v420
      %v424 = vmul.f32 %v394, %v423
      %v425 = vmul.f32 %v371, %v371
      %v426 = vmul.f32 %v373, %v373
      %v427 = vmul.f32 %v377, %v377
      %v428 = vmul.f32 %v379, %v379
      %v429 = vadd.f32 %v425, %v426
      %430 = vadd.xlane.f32.xlu0 %v429
      %v431 = vpop.xlane.xlu0 %430
      %v432 = vadd.f32 %v427, %v428
      %433 = vadd.xlane.f32.xlu0 %v432
      %v434 = vpop.xlane.xlu0 %433
      %v435 = vrsqrt.pop %v431
      %v436 = vmul.f32 %v431, %v435
      %vm437 = vcmp.eq.f32.partialorder %v431, inf
      %v438 = vsel %vm437, %v431, %v436
      %vm439 = vcmp.eq.f32.partialorder %v431, 0.0
      %v440 = vand.u32 %v431, 2147483648
      %v441 = vsel %vm439, %v440, %v438
      %v442 = vrsqrt.pop %v434
      %v443 = vmul.f32 %v434, %v442
      %vm444 = vcmp.eq.f32.partialorder %v434, inf
      %v445 = vsel %vm444, %v434, %v443
      %vm446 = vcmp.eq.f32.partialorder %v434, 0.0
      %v447 = vand.u32 %v434, 2147483648
      %v448 = vsel %vm446, %v447, %v445
      %v449 = vmax.f32 %v441, 1e-12
      %v450 = vmax.f32 %v448, 1e-12
      %v451 = vrcp.pop %v449
      %v452 = vmul.f32 1.0, %v451
      %v453 = vrcp.pop %v450
      %v454 = vmul.f32 1.0, %v453
      %456 = vset.pattern.permute.xlu0 0
      %457 = vperm.xlu0 %456, %v422
      %v458 = vpop.permute.xlu0 %457
      %461 = vset.pattern.permute.xlu0 0
      %462 = vperm.xlu0 %461, %v424
      %v463 = vpop.permute.xlu0 %462
      %v465 = vmul.f32 %v359, %v458
      %v466 = vmul.f32 %v361, %v458
      %v467 = vmul.f32 %v365, %v463
      %v468 = vmul.f32 %v367, %v463
      %v469 = vmul.f32 %v371, %v452
      %v470 = vmul.f32 %v373, %v452
      %v471 = vmul.f32 %v377, %v454
      %v472 = vmul.f32 %v379, %v454
      %v473 = vld [vmem:[%s3] sm:$0xff]
      %v474 = vld [vmem:[%s3 + $0x8] sm:$0xff]
      %475 = vmatprep.subr.mxu0 %v470
      %476 = vmatpush1.xpose.msra.mxu0 %v469
      %477 = vmatprep.subr.mxu0 %v472
      %478 = vmatpush1.xpose.msra.mxu0 %v471
      %479 = vmatprep.subr.mxu0 0.0
      %480 = vmatpush1.xpose.msra.mxu0 0.0
      %481 = vmatprep.subr.mxu0 0.0
      %482 = vmatpush1.xpose.msra.mxu0 0.0
      %483 = vmatprep.subr.mxu0 0.0
      %484 = vmatpush1.xpose.msra.mxu0 0.0
      %485 = vmatprep.subr.mxu0 0.0
      %486 = vmatpush1.xpose.msra.mxu0 0.0
      %487 = vmatprep.subr.mxu0 0.0
      %488 = vmatpush1.xpose.msra.mxu0 0.0
      %489 = vmatprep.subr.mxu0 0.0
      %490 = vmatpush1.xpose.msra.mxu0 0.0
      %491 = vmatprep.subr.mxu0 0.0
      %492 = vmatpush1.xpose.msra.mxu0 0.0
      %493 = vmatprep.subr.mxu0 0.0
      %494 = vmatpush1.xpose.msra.mxu0 0.0
      %495 = vmatprep.subr.mxu0 0.0
      %496 = vmatpush1.xpose.msra.mxu0 0.0
      %497 = vmatprep.subr.mxu0 0.0
      %498 = vmatpush1.xpose.msra.mxu0 0.0
      %499 = vmatprep.subr.mxu0 0.0
      %500 = vmatpush1.xpose.msra.mxu0 0.0
      %501 = vmatprep.subr.mxu0 0.0
      %502 = vmatpush1.xpose.msra.mxu0 0.0
      %503 = vmatprep.subr.mxu0 0.0
      %504 = vmatpush1.xpose.msra.mxu0 0.0
      %505 = vmatprep.subr.mxu0 0.0
      %506 = vmatpush1.xpose.msra.mxu0 0.0
      %507 = vmatprep.subr.mxu0 0.0
      %508 = vmatpush1.xpose.msra.mxu0 0.0
      %509 = vmatprep.subr.mxu0 0.0
      %510 = vmatpush1.xpose.msra.mxu0 0.0
      %511 = vmatprep.subr.mxu0 0.0
      %512 = vmatpush1.xpose.msra.mxu0 0.0
      %513 = vmatprep.subr.mxu0 0.0
      %514 = vmatpush1.xpose.msra.mxu0 0.0
      %515 = vmatprep.subr.mxu0 0.0
      %516 = vmatpush1.xpose.msra.mxu0 0.0
      %517 = vmatprep.subr.mxu0 0.0
      %518 = vmatpush1.xpose.msra.mxu0 0.0
      %519 = vmatprep.subr.mxu0 0.0
      %520 = vmatpush1.xpose.msra.mxu0 0.0
      %521 = vmatprep.subr.mxu0 0.0
      %522 = vmatpush1.xpose.msra.mxu0 0.0
      %523 = vmatprep.subr.mxu0 0.0
      %524 = vmatpush1.xpose.msra.mxu0 0.0
      %525 = vmatprep.subr.mxu0 0.0
      %526 = vmatpush1.xpose.msra.mxu0 0.0
      %527 = vmatprep.subr.mxu0 0.0
      %528 = vmatpush1.xpose.msra.mxu0 0.0
      %529 = vmatprep.subr.mxu0 0.0
      %530 = vmatpush1.xpose.msra.mxu0 0.0
      %531 = vmatprep.subr.mxu0 0.0
      %532 = vmatpush1.xpose.msra.mxu0 0.0
      %533 = vmatprep.subr.mxu0 0.0
      %534 = vmatpush1.xpose.msra.mxu0 0.0
      %535 = vmatprep.subr.mxu0 0.0
      %536 = vmatpush1.xpose.msra.mxu0 0.0
      %537 = vmatprep.subr.mxu0 0.0
      %538 = vmatpush1.xpose.msra.mxu0 0.0
      %539 = vmatprep.mubr.f32.mxu0 %v466
      %540 = vmatmul.mubr.f32.gmra.mrb[0].mxu0 %v465
      %v541 = vpop.f32.mrb[0].mxu0
      %v542 = vadd.f32 %v473, %v541
      %v543 = vpop.f32.mrb[0].mxu0
      %544 = vmatprep.mubr.f32.mxu0 %v468
      %545 = vmatmul.mubr.f32.gmra.mrb[0].mxu0 %v467
      %v546 = vpop.f32.mrb[0].mxu0
      %v547 = vadd.f32 %v474, %v546
      %v548 = vpop.f32.mrb[0].mxu0
      %549 = vdwg.mxu0
      %v550 = vsel %vm273, %v542, -inf
      %551 = vmax.xlane.f32.xlu0 %v550
      %v552 = vpop.xlane.xlu0 %551
      %v553 = vsel %vm273, %v547, -inf
      %554 = vmax.xlane.f32.xlu0 %v553
      %v555 = vpop.xlane.xlu0 %554
      %v556 = vsub.f32 %v542, %v552
      %v557 = vsub.f32 %v547, %v555
      %v558 = vmul.f32 %v556, 1.442695
      %v559 = vpow.pop %v558
      %v560 = vmul.f32 %v557, 1.442695
      %v561 = vpow.pop %v560
      %v562 = vsel %vm273, %v559, 0.0
      %563 = vadd.xlane.f32.xlu0 %v562
      %v564 = vpop.xlane.xlu0 %563
      %v565 = vsel %vm273, %v561, 0.0
      %566 = vadd.xlane.f32.xlu0 %v565
      %v567 = vpop.xlane.xlu0 %566
      %v568 = vrcp.pop %v564
      %v569 = vmul.f32 1.0, %v568
      %v570 = vrcp.pop %v567
      %v571 = vmul.f32 1.0, %v570
      %v572 = vmul.f32 %v559, %v569
      %v573 = vmul.f32 %v561, %v571
      %v574 = vld [vmem:[%s4] sm:$0xff]
      %v575 = vld [vmem:[%s4 + $0x8] sm:$0xff]
      %v577 = vsel %vm273, %v574, 0
      %v580 = vsel %vm273, %v575, 0
      %582 = vmatprep.subr.mxu0 0.0
      %583 = vmatpush1.msra.mxu0 %v572
      %584 = vmatprep.subr.mxu0 0.0
      %585 = vmatpush1.msra.mxu0 %v573
      %586 = vmatprep.subr.mxu0 0.0
      %587 = vmatpush1.msra.mxu0 0.0
      %588 = vmatprep.subr.mxu0 0.0
      %589 = vmatpush1.msra.mxu0 0.0
      %590 = vmatprep.subr.mxu0 0.0
      %591 = vmatpush1.msra.mxu0 0.0
      %592 = vmatprep.subr.mxu0 0.0
      %593 = vmatpush1.msra.mxu0 0.0
      %594 = vmatprep.subr.mxu0 0.0
      %595 = vmatpush1.msra.mxu0 0.0
      %596 = vmatprep.subr.mxu0 0.0
      %597 = vmatpush1.msra.mxu0 0.0
      %598 = vmatprep.subr.mxu0 0.0
      %599 = vmatpush1.msra.mxu0 0.0
      %600 = vmatprep.subr.mxu0 0.0
      %601 = vmatpush1.msra.mxu0 0.0
      %602 = vmatprep.subr.mxu0 0.0
      %603 = vmatpush1.msra.mxu0 0.0
      %604 = vmatprep.subr.mxu0 0.0
      %605 = vmatpush1.msra.mxu0 0.0
      %606 = vmatprep.subr.mxu0 0.0
      %607 = vmatpush1.msra.mxu0 0.0
      %608 = vmatprep.subr.mxu0 0.0
      %609 = vmatpush1.msra.mxu0 0.0
      %610 = vmatprep.subr.mxu0 0.0
      %611 = vmatpush1.msra.mxu0 0.0
      %612 = vmatprep.subr.mxu0 0.0
      %613 = vmatpush1.msra.mxu0 0.0
      %614 = vmatprep.subr.mxu0 0.0
      %615 = vmatpush1.msra.mxu0 0.0
      %616 = vmatprep.subr.mxu0 0.0
      %617 = vmatpush1.msra.mxu0 0.0
      %618 = vmatprep.subr.mxu0 0.0
      %619 = vmatpush1.msra.mxu0 0.0
      %620 = vmatprep.subr.mxu0 0.0
      %621 = vmatpush1.msra.mxu0 0.0
      %622 = vmatprep.subr.mxu0 0.0
      %623 = vmatpush1.msra.mxu0 0.0
      %624 = vmatprep.subr.mxu0 0.0
      %625 = vmatpush1.msra.mxu0 0.0
      %626 = vmatprep.subr.mxu0 0.0
      %627 = vmatpush1.msra.mxu0 0.0
      %628 = vmatprep.subr.mxu0 0.0
      %629 = vmatpush1.msra.mxu0 0.0
      %630 = vmatprep.subr.mxu0 0.0
      %631 = vmatpush1.msra.mxu0 0.0
      %632 = vmatprep.subr.mxu0 0.0
      %633 = vmatpush1.msra.mxu0 0.0
      %634 = vmatprep.subr.mxu0 0.0
      %635 = vmatpush1.msra.mxu0 0.0
      %636 = vmatprep.subr.mxu0 0.0
      %637 = vmatpush1.msra.mxu0 0.0
      %638 = vmatprep.subr.mxu0 0.0
      %639 = vmatpush1.msra.mxu0 0.0
      %640 = vmatprep.subr.mxu0 0.0
      %641 = vmatpush1.msra.mxu0 0.0
      %642 = vmatprep.subr.mxu0 0.0
      %643 = vmatpush1.msra.mxu0 0.0
      %644 = vmatprep.subr.mxu0 0.0
      %645 = vmatpush1.msra.mxu0 0.0
      %646 = vmatprep.mubr.f32.mxu0 0.0
      %647 = vmatmul.mubr.f32.gmra.mrb[0].mxu0 %v577
      %v648 = vpop.f32.mrb[0].mxu0
      %v649 = vadd.f32 0.0, %v648
      %v650 = vpop.f32.mrb[0].mxu0
      %651 = vmatprep.mubr.f32.mxu0 0.0
      %652 = vmatmul.mubr.f32.gmra.mrb[0].mxu0 %v580
      %v653 = vpop.f32.mrb[0].mxu0
      %v654 = vadd.f32 0.0, %v653
      %v655 = vpop.f32.mrb[0].mxu0
      %656 = vdwg.mxu0
      %v658 = vsel %vm273, %v649, 0
      %v661 = vsel %vm273, %v654, 0
      %663 = vmatprep.subr.mxu0 %v385
      %664 = vmatpush1.msra.mxu0 %v383
      %665 = vmatprep.subr.mxu0 %v391
      %666 = vmatpush1.msra.mxu0 %v389
      %667 = vmatprep.subr.mxu0 0.0
      %668 = vmatpush1.msra.mxu0 0.0
      %669 = vmatprep.subr.mxu0 0.0
      %670 = vmatpush1.msra.mxu0 0.0
      %671 = vmatprep.subr.mxu0 0.0
      %672 = vmatpush1.msra.mxu0 0.0
      %673 = vmatprep.subr.mxu0 0.0
      %674 = vmatpush1.msra.mxu0 0.0
      %675 = vmatprep.subr.mxu0 0.0
      %676 = vmatpush1.msra.mxu0 0.0
      %677 = vmatprep.subr.mxu0 0.0
      %678 = vmatpush1.msra.mxu0 0.0
      %679 = vmatprep.subr.mxu0 0.0
      %680 = vmatpush1.msra.mxu0 0.0
      %681 = vmatprep.subr.mxu0 0.0
      %682 = vmatpush1.msra.mxu0 0.0
      %683 = vmatprep.subr.mxu0 0.0
      %684 = vmatpush1.msra.mxu0 0.0
      %685 = vmatprep.subr.mxu0 0.0
      %686 = vmatpush1.msra.mxu0 0.0
      %687 = vmatprep.subr.mxu0 0.0
      %688 = vmatpush1.msra.mxu0 0.0
      %689 = vmatprep.subr.mxu0 0.0
      %690 = vmatpush1.msra.mxu0 0.0
      %691 = vmatprep.subr.mxu0 0.0
      %692 = vmatpush1.msra.mxu0 0.0
      %693 = vmatprep.subr.mxu0 0.0
      %694 = vmatpush1.msra.mxu0 0.0
      %695 = vmatprep.subr.mxu0 0.0
      %696 = vmatpush1.msra.mxu0 0.0
      %697 = vmatprep.subr.mxu0 0.0
      %698 = vmatpush1.msra.mxu0 0.0
      %699 = vmatprep.subr.mxu0 0.0
      %700 = vmatpush1.msra.mxu0 0.0
      %701 = vmatprep.subr.mxu0 0.0
      %702 = vmatpush1.msra.mxu0 0.0
      %703 = vmatprep.subr.mxu0 0.0
      %704 = vmatpush1.msra.mxu0 0.0
      %705 = vmatprep.subr.mxu0 0.0
      %706 = vmatpush1.msra.mxu0 0.0
      %707 = vmatprep.subr.mxu0 0.0
      %708 = vmatpush1.msra.mxu0 0.0
      %709 = vmatprep.subr.mxu0 0.0
      %710 = vmatpush1.msra.mxu0 0.0
      %711 = vmatprep.subr.mxu0 0.0
      %712 = vmatpush1.msra.mxu0 0.0
      %713 = vmatprep.subr.mxu0 0.0
      %714 = vmatpush1.msra.mxu0 0.0
      %715 = vmatprep.subr.mxu0 0.0
      %716 = vmatpush1.msra.mxu0 0.0
      %717 = vmatprep.subr.mxu0 0.0
      %718 = vmatpush1.msra.mxu0 0.0
      %719 = vmatprep.subr.mxu0 0.0
      %720 = vmatpush1.msra.mxu0 0.0
      %721 = vmatprep.subr.mxu0 0.0
      %722 = vmatpush1.msra.mxu0 0.0
      %723 = vmatprep.subr.mxu0 0.0
      %724 = vmatpush1.msra.mxu0 0.0
      %725 = vmatprep.subr.mxu0 0.0
      %726 = vmatpush1.msra.mxu0 0.0
      %727 = vmatprep.mubr.f32.mxu0 0.0
      %728 = vmatmul.mubr.f32.gmra.mrb[0].mxu0 %v658
      %v729 = vpop.f32.mrb[0].mxu0
      %v730 = vadd.f32 0.0, %v729
      %v731 = vpop.f32.mrb[0].mxu0
      %v732 = vadd.f32 0.0, %v731
      %733 = vmatprep.mubr.f32.mxu0 0.0
      %734 = vmatmul.mubr.f32.gmra.mrb[0].mxu0 %v661
      %v735 = vpop.f32.mrb[0].mxu0
      %v736 = vadd.f32 0.0, %v735
      %v737 = vpop.f32.mrb[0].mxu0
      %v738 = vadd.f32 0.0, %v737
      %739 = vdwg.mxu0
      %740 = vst [vmem:[%s224] sm:$0xff] %v730
      %741 = vst [vmem:[%s224 + $0x8] sm:$0xff] %v732
      %742 = vst [vmem:[%s224 + $0x10] sm:$0xff] %v736
      %743 = vst [vmem:[%s224 + $0x18] sm:$0xff] %v738
      %p744 = scmp.lt.s32.totalorder %s16, 1
      %s745 = scalar_select %p744, %s16, 1
      %s746 = smul.addr %s745, 4
      %s747 = smul.addr %s746, 8
      %s748 = scalar_lea.vmem %s5, %s747
      // Predicated region
      $region41: #{attention_forward.1} parent=39 // pred_check
        %p749 = pneg %p144
      $region42: #{attention_forward.1} parent=39 // pred_check_branch
        %751 = sbr.rel (%p749) target = $region44
      $region43: #{attention_forward.1} parent=39 // pred_region
        _
      $region44: #{attention_forward.1} parent=39 // pred_fallthru
        _
    $region40: #{attention_forward.1} parent=5 // pred_fallthru
      _
    %p752 = scmp.le.s32.totalorder 2, %s11
    // Predicated region
    $region45: #{attention_forward.1} parent=5 // pred_check
      %p753 = pneg %p752
    $region46: #{attention_forward.1} parent=5 // pred_check_branch
      %755 = sbr.rel (%p753) target = $region48
    $region47: #{attention_forward.1} parent=5 // pred_region
      %s756 = ssub.s32 %s11, 2
      // Predicated region
      $region49: #{attention_forward.1} parent=47 // pred_check
        %p757 = pneg %p150
      $region50: #{attention_forward.1} parent=47 // pred_check_branch
        %759 = sbr.rel (%p757) target = $region52
      $region51: #{attention_forward.1} parent=47 // pred_region
        %p760 = scmp.lt.s32.totalorder %s17, 1
        %s761 = scalar_select %p760, %s17, 1
        %s762 = smul.addr %s761, 4
        %s763 = smul.addr %s762, 8
        %s764 = scalar_lea.vmem %s5, %s763
      $region52: #{attention_forward.1} parent=47 // pred_fallthru
        _
    $region48: #{attention_forward.1} parent=5 // pred_fallthru
      _
  $region6: #{attention_forward.1} parent=0 // loop_footer
    %s15 = sadd.s32 1, %s11
  $region7: #{attention_forward.1} parent=0 // loop_footer_branch
    %10 = sbr.rel target = $region3
  $region8: #{attention_forward.1} parent=0 // loop_exit
    _

</llo_original>
